<compile_context>
chip_gen: v7x
topology: tpu7x:2x2x1
jax: 0.10.0
libtpu: 0.0.40
codegen_flags: <defaults>
</compile_context>

<pallas_src>
import functools

import jax
import jax.numpy as jnp
import numpy as np
from jax.experimental import pallas as pl
from jax.experimental.pallas import tpu as pltpu

BN_EPS = 1e-5
LRELU_SLOPE = 0.2
OUT_PAD = 8          # final conv Cout padded 1 -> 8 (small masked store)


# -----------------------------------------------------------------------------
# compiler params / BlockSpec helpers
# -----------------------------------------------------------------------------
def _vmem_limit_bytes():
    # Leave headroom for Mosaic scratch: request at most 3/4 of physical VMEM and
    # never more than 64 MiB (v5e/v6e have 128 MiB per core, v7x only 64 MiB).
    try:
        cap = int(pltpu.get_tpu_info().vmem_capacity_bytes)
    except Exception:
        cap = 128 * 1024 * 1024
    return min(64 * 1024 * 1024, (cap * 3) // 4)


def _compiler_params():
    return pltpu.CompilerParams(
        dimension_semantics=("parallel", "parallel"),
        vmem_limit_bytes=_vmem_limit_bytes())


def _tile_spec(block):
    # One (batch, row-tile) block per grid step; trailing dims taken whole.
    zeros = (0,) * (len(block) - 2)
    return pl.BlockSpec(block, lambda b, t: (b, t) + zeros)


def _full_spec(shape):
    # Small array (weights / scale-shift) fully resident in VMEM every grid step.
    zeros = (0,) * len(shape)
    return pl.BlockSpec(shape, lambda b, t: zeros)


# -----------------------------------------------------------------------------
# Kernels
# -----------------------------------------------------------------------------
def _branch_conv3x3_kernel(xwin_ref, w_ref, y_ref, st_ref, *, TH, W):
    """Fused branch convs: one block-diagonal 3x3 conv (K = 9*8 = 72 -> 48 channels).

    xwin_ref: (1, 1, TH+2, W+2, 8) zero-padded, preprocessed input window.
    Emits the raw (pre-BN) conv output and per-tile (sum, sum-of-squares) BN partials.
    """
    x = xwin_ref[0, 0]                                              # (TH+2, W+2, 8) f32
    cols = [x[dy:dy + TH, dx:dx + W, :].reshape(TH * W, 8)
            for dy in range(3) for dx in range(3)]
    slab = jnp.concatenate(cols, axis=-1).astype(jnp.bfloat16)      # (TH*W, 72)
    y = jnp.dot(slab, w_ref[...], preferred_element_type=jnp.float32)   # (TH*W, 48) f32
    st_ref[0, 0] = jnp.concatenate(
        [jnp.sum(y, axis=0, keepdims=True),
         jnp.sum(y * y, axis=0, keepdims=True)], axis=0)
    y_ref[0, 0] = y.reshape(TH, W, 48).astype(y_ref.dtype)


def _branch_conv1x1_kernel(y1_ref, ss_ref, w_ref, y_ref, st_ref, *, TH, W):
    """BN1 + LReLU (globally finalized scale/shift) then block-diagonal 1x1 conv 48->64."""
    a = y1_ref[0, 0] * ss_ref[0] + ss_ref[1]                        # (TH, W, 48) f32
    a = jnp.where(a > 0, a, LRELU_SLOPE * a)
    y = jnp.dot(a.reshape(TH * W, 48).astype(jnp.bfloat16), w_ref[...],
                preferred_element_type=jnp.float32)                 # (TH*W, 64) f32
    st_ref[0, 0] = jnp.concatenate(
        [jnp.sum(y, axis=0, keepdims=True),
         jnp.sum(y * y, axis=0, keepdims=True)], axis=0)
    y_ref[0, 0] = y.reshape(TH, W, 64).astype(y_ref.dtype)


def _conv3x3_kernel(ywin_ref, ss_ref, w_ref, y_ref, st_ref, *, TH, W, T):
    """BN + LReLU on a 1-row-haloed window, zero the conv-padding border, then a 3x3
    conv as 3 dy-group bf16 matmuls (K = 3*Cin) accumulated in f32."""
    Wp = W + 2
    a = ywin_ref[0, 0] * ss_ref[0] + ss_ref[1]                      # (TH+2, Wp, Cin) f32
    a = jnp.where(a > 0, a, LRELU_SLOPE * a)
    # PyTorch zero-pads the *post-activation* conv input: mask the window positions
    # that correspond to the image border (the wrapper padded the RAW tensor with 0).
    t = pl.program_id(1)
    r = jax.lax.broadcasted_iota(jnp.int32, (TH + 2, Wp, 1), 0)
    c = jax.lax.broadcasted_iota(jnp.int32, (TH + 2, Wp, 1), 1)
    pad = jnp.logical_or(
        jnp.logical_or(jnp.logical_and(r == 0, t == 0),
                       jnp.logical_and(r == TH + 1, t == T - 1)),
        jnp.logical_or(c == 0, c == Wp - 1))
    a = jnp.where(pad, 0.0, a)
    cin = a.shape[-1]
    acc = None
    for dy in range(3):                                             # dy-split: no K=576 slab
        slab = jnp.concatenate(
            [a[dy:dy + TH, dx:dx + W, :].reshape(TH * W, cin) for dx in range(3)],
            axis=-1).astype(jnp.bfloat16)                           # (TH*W, 3*Cin)
        part = jnp.dot(slab, w_ref[dy], preferred_element_type=jnp.float32)
        acc = part if acc is None else acc + part                   # (TH*W, Cout) f32
    st_ref[0, 0] = jnp.concatenate(
        [jnp.sum(acc, axis=0, keepdims=True),
         jnp.sum(acc * acc, axis=0, keepdims=True)], axis=0)
    y_ref[0, 0] = acc.reshape(TH, W, acc.shape[-1]).astype(y_ref.dtype)


def _bn_lrelu_kernel(y_ref, ss_ref, o_ref):
    """Final BN + LeakyReLU epilogue (elementwise)."""
    a = y_ref[0, 0] * ss_ref[0] + ss_ref[1]
    o_ref[0, 0] = jnp.where(a > 0, a, LRELU_SLOPE * a)


# -----------------------------------------------------------------------------
# Wrapper-side glue: weight fusion, halo windows, BatchNorm stat finalization
# -----------------------------------------------------------------------------
def _prepare_fused(params):
    f32, bf16 = jnp.float32, jnp.bfloat16

    # Fused first-layer 3x3: block-diag over in-channels [amb(2)|ent(2)|log(4)] and
    # out-channels [amb(16)|ent(16)|log(16)] -> (72, 48) in im2col (dy, dx, cin) order.
    w1 = jnp.zeros((3, 3, 8, 48), f32)
    w1 = w1.at[:, :, 0:2, 0:16].set(params["amb_w1"])
    w1 = w1.at[:, :, 2:4, 16:32].set(params["ent_w1"])
    w1 = w1.at[:, :, 4:8, 32:48].set(params["log_w1"])
    w1 = w1.reshape(9 * 8, 48).astype(bf16)
    gb1 = jnp.concatenate([params["amb_gb1"], params["ent_gb1"], params["log_gb1"]],
                          axis=1)                                            # (2, 48)

    # Fused 1x1: block-diag (48, 64); output order matches torch.cat order.
    w2 = jnp.zeros((48, 64), f32)
    w2 = w2.at[0:16, 0:16].set(params["amb_w2"])
    w2 = w2.at[16:32, 16:32].set(params["ent_w2"])
    w2 = w2.at[32:48, 32:64].set(params["log_w2"])
    w2 = w2.astype(bf16)
    gb2 = jnp.concatenate([params["amb_gb2"], params["ent_gb2"], params["log_gb2"]],
                          axis=1)                                            # (2, 64)

    # Final convs: (3,3,64,Cout) -> (3, 3*64, Cout) for the dy-split matmuls.
    w3 = params["fin_w1"].reshape(3, 192, 64).astype(bf16)
    gb3 = params["fin_gb1"]

    w4 = jnp.zeros((3, 3, 64, OUT_PAD), f32)
    w4 = w4.at[:, :, :, 0:1].set(params["fin_w2"])
    w4 = w4.reshape(3, 192, OUT_PAD).astype(bf16)
    gb4 = jnp.zeros((2, OUT_PAD), f32).at[:, 0:1].set(params["fin_gb2"])
    return w1, gb1, w2, gb2, w3, gb3, w4, gb4


def _window_rows(x, TH):
    """(B, H, W, C) -> zero-pad H/W by 1 and gather overlapping row windows:
    (B, T, TH+2, W+2, C).  TODO(synk): replace with in-kernel halo DMA for large T."""
    B, H, W, C = x.shape
    T = H // TH
    xp = jnp.pad(x, ((0, 0), (1, 1), (1, 1), (0, 0)))
    return jnp.stack([xp[:, t * TH:t * TH + TH + 2] for t in range(T)], axis=1)


def _finalize_bn(stats, gb, n):
    """Reduce per-tile (sum, sumsq) partials into global BN (scale, shift)."""
    s = jnp.sum(stats[:, :, 0, :], axis=(0, 1))
    sq = jnp.sum(stats[:, :, 1, :], axis=(0, 1))
    mean = s / n
    var = jnp.maximum(sq / n - mean * mean, 0.0)
    scale = gb[0] * jax.lax.rsqrt(var + BN_EPS)
    shift = gb[1] - mean * scale
    return jnp.stack([scale, shift], axis=0)                        # (2, C) f32


# -----------------------------------------------------------------------------
# Public wrapper (NCHW in / NCHW out)
# -----------------------------------------------------------------------------
def discriminator_forward(params, pred_UNet, pred_YNet, pred_UNet_soft,
                          pred_VNet_soft, entmap1, entmap2, thr=0.5):
    """Inputs are NCHW (PyTorch convention).  Returns NCHW (B, 1, H, W)."""
    to_nhwc = lambda x: jnp.transpose(x, (0, 2, 3, 1)).astype(jnp.float32)
    pus, pvs = to_nhwc(pred_UNet_soft), to_nhwc(pred_VNet_soft)
    ent = jnp.concatenate([to_nhwc(entmap1), to_nhwc(entmap2)], axis=-1)
    logits = jnp.concatenate([to_nhwc(pred_UNet), to_nhwc(pred_YNet)], axis=-1)

    B, H, W, _ = pus.shape
    TH = 8 if H % 8 == 0 else H          # row-tile height (pick larger for big images)
    T = H // TH
    NT = B * H * W
    nf = float(NT)

    # Elementwise preprocessing + channel fusion (wrapper, so the conv zero-padding is
    # applied to the already-preprocessed tensor):
    #   [1 - xor(pus>thr, pvs>thr) (2ch) | 1 - entropy (2ch) | logits (4ch)]
    xorv = (jnp.greater(pus, thr) != jnp.greater(pvs, thr)).astype(jnp.float32)
    fused = jnp.concatenate([1.0 - xorv, 1.0 - ent, logits], axis=-1)    # (B, H, W, 8)

    w1, gb1, w2, gb2, w3, gb3, w4, gb4 = _prepare_fused(params)
    cp = _compiler_params()
    f32 = jnp.float32

    # ---- pass 1: fused branch 3x3 conv (K=72 -> 48) + BN1 partial stats -------------
    xwin = _window_rows(fused, TH)                                   # (B,T,TH+2,W+2,8)
    y1, s1 = pl.pallas_call(
        functools.partial(_branch_conv3x3_kernel, TH=TH, W=W),
        grid=(B, T),
        in_specs=[_tile_spec((1, 1, TH + 2, W + 2, 8)), _full_spec((72, 48))],
        out_specs=(_tile_spec((1, 1, TH, W, 48)), _tile_spec((1, 1, 2, 48))),
        out_shape=(jax.ShapeDtypeStruct((B, T, TH, W, 48), f32),
                   jax.ShapeDtypeStruct((B, T, 2, 48), f32)),
        compiler_params=cp,
        cost_estimate=pl.CostEstimate(
            flops=2 * NT * 72 * 48, transcendentals=0,
            bytes_accessed=xwin.size * 4 + 72 * 48 * 2 + NT * 48 * 4 + B * T * 2 * 48 * 4),
    )(xwin, w1)
    ss1 = _finalize_bn(s1, gb1, nf)

    # ---- pass 2: BN1+LReLU, fused branch 1x1 conv (48 -> 64) + BN2 stats ------------
    y2, s2 = pl.pallas_call(
        functools.partial(_branch_conv1x1_kernel, TH=TH, W=W),
        grid=(B, T),
        in_specs=[_tile_spec((1, 1, TH, W, 48)), _full_spec((2, 48)),
                  _full_spec((48, 64))],
        out_specs=(_tile_spec((1, 1, TH, W, 64)), _tile_spec((1, 1, 2, 64))),
        out_shape=(jax.ShapeDtypeStruct((B, T, TH, W, 64), f32),
                   jax.ShapeDtypeStruct((B, T, 2, 64), f32)),
        compiler_params=cp,
        cost_estimate=pl.CostEstimate(
            flops=2 * NT * 48 * 64, transcendentals=0,
            bytes_accessed=NT * 48 * 4 + 48 * 64 * 2 + NT * 64 * 4 + B * T * 2 * 64 * 4),
    )(y1, ss1, w2)
    ss2 = _finalize_bn(s2, gb2, nf)

    # ---- pass 3: BN2+LReLU, 3x3 conv (64 -> 64) + BN3 stats -------------------------
    y2win = _window_rows(y2.reshape(B, H, W, 64), TH)                # (B,T,TH+2,W+2,64)
    y3, s3 = pl.pallas_call(
        functools.partial(_conv3x3_kernel, TH=TH, W=W, T=T),
        grid=(B, T),
        in_specs=[_tile_spec((1, 1, TH + 2, W + 2, 64)), _full_spec((2, 64)),
                  _full_spec((3, 192, 64))],
        out_specs=(_tile_spec((1, 1, TH, W, 64)), _tile_spec((1, 1, 2, 64))),
        out_shape=(jax.ShapeDtypeStruct((B, T, TH, W, 64), f32),
                   jax.ShapeDtypeStruct((B, T, 2, 64), f32)),
        compiler_params=cp,
        cost_estimate=pl.CostEstimate(
            flops=2 * NT * 576 * 64, transcendentals=0,
            bytes_accessed=y2win.size * 4 + 3 * 192 * 64 * 2 + NT * 64 * 4
                           + B * T * 2 * 64 * 4),
    )(y2win, ss2, w3)
    ss3 = _finalize_bn(s3, gb3, nf)

    # ---- pass 4: BN3+LReLU, 3x3 conv (64 -> 1, Cout padded to 8) + BN4 stats --------
    y3win = _window_rows(y3.reshape(B, H, W, 64), TH)
    y4, s4 = pl.pallas_call(
        functools.partial(_conv3x3_kernel, TH=TH, W=W, T=T),
        grid=(B, T),
        in_specs=[_tile_spec((1, 1, TH + 2, W + 2, 64)), _full_spec((2, 64)),
                  _full_spec((3, 192, OUT_PAD))],
        out_specs=(_tile_spec((1, 1, TH, W, OUT_PAD)), _tile_spec((1, 1, 2, OUT_PAD))),
        out_shape=(jax.ShapeDtypeStruct((B, T, TH, W, OUT_PAD), f32),
                   jax.ShapeDtypeStruct((B, T, 2, OUT_PAD), f32)),
        compiler_params=cp,
        cost_estimate=pl.CostEstimate(
            flops=2 * NT * 576 * OUT_PAD, transcendentals=0,
            bytes_accessed=y3win.size * 4 + 3 * 192 * OUT_PAD * 2 + NT * OUT_PAD * 4
                           + B * T * 2 * OUT_PAD * 4),
    )(y3win, ss3, w4)
    ss4 = _finalize_bn(s4, gb4, nf)

    # ---- pass 5: final BN4 + LeakyReLU epilogue (elementwise) -----------------------
    out8 = pl.pallas_call(
        _bn_lrelu_kernel,
        grid=(B, T),
        in_specs=[_tile_spec((1, 1, TH, W, OUT_PAD)), _full_spec((2, OUT_PAD))],
        out_specs=_tile_spec((1, 1, TH, W, OUT_PAD)),
        out_shape=jax.ShapeDtypeStruct((B, T, TH, W, OUT_PAD), f32),
        compiler_params=cp,
        cost_estimate=pl.CostEstimate(
            flops=3 * NT * OUT_PAD, transcendentals=0,
            bytes_accessed=2 * NT * OUT_PAD * 4 + 2 * OUT_PAD * 4),
    )(y4, ss4)

    out = out8.reshape(B, H, W, OUT_PAD)[..., 0:1]       # only channel 0 is real
    return jnp.transpose(out, (0, 3, 1, 2))              # NCHW (B, 1, H, W)


# -----------------------------------------------------------------------------
# Deterministic parameter init (weights in HWIO / IO layout, gamma-beta stacked)
# -----------------------------------------------------------------------------
def init_params(key):
    ks = jax.random.split(key, 16)

    def w3(k, cin, cout):
        return jax.random.normal(k, (3, 3, cin, cout), jnp.float32) / np.sqrt(9 * cin)

    def w1(k, cin, cout):
        return jax.random.normal(k, (cin, cout), jnp.float32) / np.sqrt(cin)

    def gb(k, c):
        g = 1.0 + 0.1 * jax.random.normal(k, (c,), jnp.float32)
        b = 0.1 * jax.random.normal(jax.random.fold_in(k, 1), (c,), jnp.float32)
        return jnp.stack([g, b], axis=0)   # (2, C): row0 = gamma, row1 = beta

    return {
        "amb_w1": w3(ks[0], 2, 16),  "amb_gb1": gb(ks[1], 16),
        "amb_w2": w1(ks[2], 16, 16), "amb_gb2": gb(ks[3], 16),
        "ent_w1": w3(ks[4], 2, 16),  "ent_gb1": gb(ks[5], 16),
        "ent_w2": w1(ks[6], 16, 16), "ent_gb2": gb(ks[7], 16),
        "log_w1": w3(ks[8], 4, 16),  "log_gb1": gb(ks[9], 16),
        "log_w2": w1(ks[10], 16, 32), "log_gb2": gb(ks[11], 32),
        "fin_w1": w3(ks[12], 64, 64), "fin_gb1": gb(ks[13], 64),
        "fin_w2": w3(ks[14], 64, 1),  "fin_gb2": gb(ks[15], 1),
    }


# -----------------------------------------------------------------------------
# Pure-JAX reference (f32 everywhere) for correctness check
# -----------------------------------------------------------------------------
def reference_forward(p, pred_UNet, pred_YNet, pred_UNet_soft, pred_VNet_soft,
                      entmap1, entmap2, thr=0.5):
    to_nhwc = lambda x: jnp.transpose(x, (0, 2, 3, 1)).astype(jnp.float32)
    pu, py = to_nhwc(pred_UNet), to_nhwc(pred_YNet)
    pus, pvs = to_nhwc(pred_UNet_soft), to_nhwc(pred_VNet_soft)
    e1, e2 = to_nhwc(entmap1), to_nhwc(entmap2)

    def conv3(x, w):
        return jax.lax.conv_general_dilated(
            x, w, window_strides=(1, 1), padding=((1, 1), (1, 1)),
            dimension_numbers=("NHWC", "HWIO", "NHWC"))

    def bn_lrelu(x, gb):
        g, b = gb[0], gb[1]
        m = jnp.mean(x, axis=(0, 1, 2), keepdims=True)
        v = jnp.mean((x - m) ** 2, axis=(0, 1, 2), keepdims=True)
        xn = (x - m) * jax.lax.rsqrt(v + BN_EPS) * g + b
        return jnp.where(xn > 0, xn, LRELU_SLOPE * xn)

    ub = (pus > thr).astype(jnp.int32)
    yb = (pvs > thr).astype(jnp.int32)
    amb = jnp.bitwise_xor(ub, yb).astype(jnp.float32)
    unc = jnp.concatenate([e1, e2], axis=-1)
    logits = jnp.concatenate([pu, py], axis=-1)

    def branch(x, w1_, gb1, w2_, gb2):
        y = bn_lrelu(conv3(x, w1_), gb1)
        return bn_lrelu(jnp.einsum("bhwi,io->bhwo", y, w2_), gb2)

    a = branch(1.0 - amb, p["amb_w1"], p["amb_gb1"], p["amb_w2"], p["amb_gb2"])
    e = branch(1.0 - unc, p["ent_w1"], p["ent_gb1"], p["ent_w2"], p["ent_gb2"])
    l = branch(logits, p["log_w1"], p["log_gb1"], p["log_w2"], p["log_gb2"])
    x = jnp.concatenate([a, e, l], axis=-1)
    x = bn_lrelu(conv3(x, p["fin_w1"]), p["fin_gb1"])
    x = bn_lrelu(conv3(x, p["fin_w2"]), p["fin_gb2"])
    return jnp.transpose(x, (0, 3, 1, 2))   # NCHW


# -----------------------------------------------------------------------------
if __name__ == "__main__":
    B, C, H, W = 2, 2, 16, 16
    key = jax.random.PRNGKey(0)
    kp, k1, k2, k3, k4, k5, k6 = jax.random.split(key, 7)

    params = init_params(kp)

    pred_UNet = jax.random.normal(k1, (B, C, H, W), jnp.float32)
    pred_YNet = jax.random.normal(k2, (B, C, H, W), jnp.float32)
    pred_UNet_soft = jax.nn.sigmoid(jax.random.normal(k3, (B, C, H, W), jnp.float32))
    pred_VNet_soft = jax.nn.sigmoid(jax.random.normal(k4, (B, C, H, W), jnp.float32))
    entmap1 = jax.random.uniform(k5, (B, 1, H, W), jnp.float32)
    entmap2 = jax.random.uniform(k6, (B, 1, H, W), jnp.float32)

    out = discriminator_forward(params, pred_UNet, pred_YNet, pred_UNet_soft,
                                pred_VNet_soft, entmap1, entmap2, thr=0.5)
    out = jax.block_until_ready(out)
    assert out.shape == (B, 1, H, W), out.shape

    ref = jax.block_until_ready(
        reference_forward(params, pred_UNet, pred_YNet, pred_UNet_soft,
                          pred_VNet_soft, entmap1, entmap2, thr=0.5))
    # Kernel runs its matmuls with bf16 operands (f32 accumulation / BN statistics);
    # tolerance is relaxed vs the all-f32 reference accordingly.
    np.testing.assert_allclose(np.asarray(out), np.asarray(ref), atol=5e-2, rtol=5e-2)

    print("KERNEL_OK")
</pallas_src>

<mosaic_0001>
module attributes {stable_mosaic.version = 11 : i64} {
  func.func @_branch_conv3x3_kernel(%arg0: i32, %arg1: i32, %arg2: memref<1x1x10x18x8xf32, #tpu.memory_space<vmem>>, %arg3: memref<72x48xbf16, #tpu.memory_space<vmem>>, %arg4: memref<1x1x8x16x48xf32, #tpu.memory_space<vmem>>, %arg5: memref<1x1x2x48xf32, #tpu.memory_space<vmem>>) attributes {dimension_semantics = [#tpu.dimension_semantics<parallel>, #tpu.dimension_semantics<parallel>], iteration_bounds = array<i64: 2, 2>, scalar_prefetch = 0 : i64, scratch_operands = 0 : i64, tpu.core_type = #tpu.core_type<tc>, window_params = [{transform_indices = @transform_0, window_bounds = array<i64: 1, 1, 10, 18, 8>}, {pipeline_mode = #tpu.pipeline_mode<synchronous>, transform_indices = @transform_1, window_bounds = array<i64: 72, 48>}, {transform_indices = @transform_2, window_bounds = array<i64: 1, 1, 8, 16, 48>}, {transform_indices = @transform_3, window_bounds = array<i64: 1, 1, 2, 48>}]} {
    %c0 = arith.constant 0 : index
    %c0_0 = arith.constant 0 : index
    %c0_1 = arith.constant 0 : index
    %c0_2 = arith.constant 0 : index
    %c0_3 = arith.constant 0 : index
    %0 = vector.load %arg2[%c0, %c0_0, %c0_1, %c0_2, %c0_3] : memref<1x1x10x18x8xf32, #tpu.memory_space<vmem>>, vector<1x1x10x18x8xf32>
    %1 = vector.shape_cast %0 : vector<1x1x10x18x8xf32> to vector<10x18x8xf32>
    %2 = vector.extract_strided_slice %1 {offsets = [0, 0, 0], sizes = [8, 16, 8], strides = [1, 1, 1]} : vector<10x18x8xf32> to vector<8x16x8xf32>
    %3 = vector.shape_cast %2 : vector<8x16x8xf32> to vector<128x8xf32>
    %4 = vector.extract_strided_slice %1 {offsets = [0, 1, 0], sizes = [8, 16, 8], strides = [1, 1, 1]} : vector<10x18x8xf32> to vector<8x16x8xf32>
    %5 = vector.shape_cast %4 : vector<8x16x8xf32> to vector<128x8xf32>
    %6 = vector.extract_strided_slice %1 {offsets = [0, 2, 0], sizes = [8, 16, 8], strides = [1, 1, 1]} : vector<10x18x8xf32> to vector<8x16x8xf32>
    %7 = vector.shape_cast %6 : vector<8x16x8xf32> to vector<128x8xf32>
    %8 = vector.extract_strided_slice %1 {offsets = [1, 0, 0], sizes = [8, 16, 8], strides = [1, 1, 1]} : vector<10x18x8xf32> to vector<8x16x8xf32>
    %9 = vector.shape_cast %8 : vector<8x16x8xf32> to vector<128x8xf32>
    %10 = vector.extract_strided_slice %1 {offsets = [1, 1, 0], sizes = [8, 16, 8], strides = [1, 1, 1]} : vector<10x18x8xf32> to vector<8x16x8xf32>
    %11 = vector.shape_cast %10 : vector<8x16x8xf32> to vector<128x8xf32>
    %12 = vector.extract_strided_slice %1 {offsets = [1, 2, 0], sizes = [8, 16, 8], strides = [1, 1, 1]} : vector<10x18x8xf32> to vector<8x16x8xf32>
    %13 = vector.shape_cast %12 : vector<8x16x8xf32> to vector<128x8xf32>
    %14 = vector.extract_strided_slice %1 {offsets = [2, 0, 0], sizes = [8, 16, 8], strides = [1, 1, 1]} : vector<10x18x8xf32> to vector<8x16x8xf32>
    %15 = vector.shape_cast %14 : vector<8x16x8xf32> to vector<128x8xf32>
    %16 = vector.extract_strided_slice %1 {offsets = [2, 1, 0], sizes = [8, 16, 8], strides = [1, 1, 1]} : vector<10x18x8xf32> to vector<8x16x8xf32>
    %17 = vector.shape_cast %16 : vector<8x16x8xf32> to vector<128x8xf32>
    %18 = vector.extract_strided_slice %1 {offsets = [2, 2, 0], sizes = [8, 16, 8], strides = [1, 1, 1]} : vector<10x18x8xf32> to vector<8x16x8xf32>
    %19 = vector.shape_cast %18 : vector<8x16x8xf32> to vector<128x8xf32>
    %20 = tpu.concatenate %3, %5, %7, %9, %11, %13, %15, %17, %19 in 1 : vector<128x8xf32>, vector<128x8xf32>, vector<128x8xf32>, vector<128x8xf32>, vector<128x8xf32>, vector<128x8xf32>, vector<128x8xf32>, vector<128x8xf32>, vector<128x8xf32> -> vector<128x72xf32>
    %21 = arith.truncf %20 : vector<128x72xf32> to vector<128x72xbf16>
    %c0_4 = arith.constant 0 : index
    %c0_5 = arith.constant 0 : index
    %22 = vector.load %arg3[%c0_4, %c0_5] : memref<72x48xbf16, #tpu.memory_space<vmem>>, vector<72x48xbf16>
    %cst = arith.constant dense<0.000000e+00> : vector<128x48xf32>
    %23 = tpu.matmul %21, %22, %cst {dimension_numbers = #tpu.dot_dimension_numbers<[1], [0], [0], [1], [0, 0, 1, 1], [], []>} : vector<128x72xbf16>, vector<72x48xbf16>, vector<128x48xf32> -> vector<128x48xf32>
    %cst_6 = arith.constant dense<0.000000e+00> : vector<48xf32>
    %24 = vector.multi_reduction <add>, %23, %cst_6 [0] : vector<128x48xf32> to vector<48xf32>
    %25 = vector.shape_cast %24 : vector<48xf32> to vector<1x48xf32>
    %26 = arith.mulf %23, %23 : vector<128x48xf32>
    %cst_7 = arith.constant dense<0.000000e+00> : vector<48xf32>
    %27 = vector.multi_reduction <add>, %26, %cst_7 [0] : vector<128x48xf32> to vector<48xf32>
    %28 = vector.shape_cast %27 : vector<48xf32> to vector<1x48xf32>
    %29 = tpu.concatenate %25, %28 in 0 : vector<1x48xf32>, vector<1x48xf32> -> vector<2x48xf32>
    %c0_8 = arith.constant 0 : index
    %c0_9 = arith.constant 0 : index
    %c0_10 = arith.constant 0 : index
    %c0_11 = arith.constant 0 : index
    %30 = vector.load %arg5[%c0_8, %c0_9, %c0_10, %c0_11] : memref<1x1x2x48xf32, #tpu.memory_space<vmem>>, vector<1x1x2x48xf32>
    %31 = vector.shape_cast %30 : vector<1x1x2x48xf32> to vector<2x48xf32>
    %32 = vector.shape_cast %29 : vector<2x48xf32> to vector<1x1x2x48xf32>
    tpu.vector_store %arg5[%c0_8, %c0_9, %c0_10, %c0_11], %32 {strides = array<i32>} : memref<1x1x2x48xf32, #tpu.memory_space<vmem>>, vector<1x1x2x48xf32>,
    %33 = vector.shape_cast %23 : vector<128x48xf32> to vector<8x16x48xf32>
    %c0_12 = arith.constant 0 : index
    %c0_13 = arith.constant 0 : index
    %c0_14 = arith.constant 0 : index
    %c0_15 = arith.constant 0 : index
    %c0_16 = arith.constant 0 : index
    %34 = vector.load %arg4[%c0_12, %c0_13, %c0_14, %c0_15, %c0_16] : memref<1x1x8x16x48xf32, #tpu.memory_space<vmem>>, vector<1x1x8x16x48xf32>
    %35 = vector.shape_cast %34 : vector<1x1x8x16x48xf32> to vector<8x16x48xf32>
    %36 = vector.shape_cast %33 : vector<8x16x48xf32> to vector<1x1x8x16x48xf32>
    tpu.vector_store %arg4[%c0_12, %c0_13, %c0_14, %c0_15, %c0_16], %36 {strides = array<i32>} : memref<1x1x8x16x48xf32, #tpu.memory_space<vmem>>, vector<1x1x8x16x48xf32>,
    return
  }
  func.func @transform_0(%arg0: i32, %arg1: i32) -> (i32, i32, i32, i32, i32) {
    %c0_i32 = arith.constant 0 : i32
    %c0_i32_0 = arith.constant 0 : i32
    %c0_i32_1 = arith.constant 0 : i32
    %c0_i32_2 = arith.constant 0 : i32
    return %arg0, %arg1, %c0_i32, %c0_i32_0, %c0_i32_1 : i32, i32, i32, i32, i32
  }
  func.func @transform_1(%arg0: i32, %arg1: i32) -> (i32, i32) {
    %c0_i32 = arith.constant 0 : i32
    %c0_i32_0 = arith.constant 0 : i32
    %c0_i32_1 = arith.constant 0 : i32
    return %c0_i32, %c0_i32_0 : i32, i32
  }
  func.func @transform_2(%arg0: i32, %arg1: i32) -> (i32, i32, i32, i32, i32) {
    %c0_i32 = arith.constant 0 : i32
    %c0_i32_0 = arith.constant 0 : i32
    %c0_i32_1 = arith.constant 0 : i32
    %c0_i32_2 = arith.constant 0 : i32
    return %arg0, %arg1, %c0_i32, %c0_i32_0, %c0_i32_1 : i32, i32, i32, i32, i32
  }
  func.func @transform_3(%arg0: i32, %arg1: i32) -> (i32, i32, i32, i32) {
    %c0_i32 = arith.constant 0 : i32
    %c0_i32_0 = arith.constant 0 : i32
    %c0_i32_1 = arith.constant 0 : i32
    return %arg0, %arg1, %c0_i32, %c0_i32_0 : i32, i32, i32, i32
  }
}

</mosaic_0001>

<llo_original>
// kernel: tpu_custom_call.1
$region0: #{tpu_custom_call.1}
  #allocation0 [shape = 'u32[]', space=smem, size = 0x4, offset = 0x4, fixed_abs, tag = 'smem constant byte address 0x4 - core index']
  #allocation1 [shape = 'u32[144,128]{1,0:T(1,128)}', space=vmem, size = 0x12000, scoped, tag = 'internal scratch']
  %s0 = inlined_call_operand.hbm [shape: f32[2,2,10,18,8], index: 0, kind: input, shape index: {}]
  %s1 = inlined_call_operand.hbm [shape: bf16[72,48], index: 1, kind: input, shape index: {}]
  %s2 = inlined_call_operand.hbm [shape: f32[2,2,8,16,48], index: 2, kind: output, shape index: {0}]
  %s3 = inlined_call_operand.hbm [shape: f32[2,2,2,48], index: 3, kind: output, shape index: {1}]
  %4 = xla_tuple %s2, %s3
  %s5 = sld [smem:[#allocation0]]
  $region57: #{tpu_custom_call.1} parent=0
    _
  %s7 = ssub.s32 1, %s5
  %s8 = scalar_select 0, %s7, %s5
  $region1: #{tpu_custom_call.1} parent=0
    #allocation2 [shape = 'u8[245760]{0}', space=vmem, size = 0x3c000, scoped, tag = 'input window, operand 0']
    #allocation3 [shape = 's32[2]{0}', space=sflag, size = 0x8, scoped, tag = 'scoped memory for tpu_custom_call.1']
    #allocation4 [shape = 's32[2]{0}', space=sflag, size = 0x8, scoped, tag = 'scoped memory for tpu_custom_call.1']
    #allocation5 [shape = 'u8[18432]{0}', space=vmem, size = 0x4800, scoped, tag = 'input window, operand 1, single buffered']
    #allocation6 [shape = 's32[1]{0}', space=sflag, size = 0x4, scoped, tag = 'scoped memory for tpu_custom_call.1']
    #allocation7 [shape = 'u8[131072]{0}', space=vmem, size = 0x20000, scoped, tag = 'output window, operand 0']
    #allocation8 [shape = 'u8[2048]{0}', space=vmem, size = 0x800, scoped, tag = 'output window, operand 1']
    #allocation9 [shape = 's32[2]{0}', space=sflag, size = 0x8, scoped, tag = 'scoped memory for tpu_custom_call.1']
    %9 = vsyncpa [#allocation3], 0
    %s10 = scalar_lea.sflag [#allocation3], 1
    %11 = vsyncpa %s10, 0
    %12 = vsyncpa [#allocation6], 0
    %13 = vsyncpa [#allocation4], 0
    %s14 = scalar_lea.sflag [#allocation4], 1
    %15 = vsyncpa %s14, 0
    %16 = vsyncpa [#allocation9], 0
    %s17 = scalar_lea.sflag [#allocation9], 1
    %18 = vsyncpa %s17, 0
    loop: start=0, step=1, limit=6
    $region2: #{tpu_custom_call.1} parent=1 // loop_pre_header
      _
    $region3: #{tpu_custom_call.1} parent=1 // loop_header
      %s20 = sphi 0, %s24
      %p21 = scmp.ge.s32.totalorder %s20, 6
      %s27 = sphi 0, %s39
      %s28 = sphi 0, %s35
      %s29 = sphi 0, %s27
      %s30 = sphi 0, %s28
      %s31 = sphi 0, %s29
      %s32 = sphi 0, %s30
      %s44 = sphi 0, %s46
      %s47 = sphi 0, %s44
      %s48 = sphi 0, %s47
      %s64 = sphi 0, %s48
      %s68 = sphi 0, %s68
      %s70 = sphi 0, %s68
      %s71 = sphi 0, %s70
      %s85 = sphi 0, %s71
      %s93 = sphi 0, %s95
      %s96 = sphi 0, %s93
      %s97 = sphi 0, %s96
      %s113 = sphi 0, %s97
      %s121 = sphi 0, %s123
      %s124 = sphi 0, %s121
      %s125 = sphi 0, %s124
      %s141 = sphi 0, %s125
    $region4: #{tpu_custom_call.1} parent=1 // loop_header_branch
      %23 = sbr.rel (%p21) target = $region8
    $region5: #{tpu_custom_call.1} parent=1 // loop_body
      %s25 = ssub.s32 %s20, 1
      %s26 = ssub.s32 %s20, 2
      %s33 = sadd.s32 1, %s28
      %p34 = scmp.ge.s32.totalorder %s33, 2
      %s35 = scalar_select %p34, 0, %s33
      %s36 = sadd.s32 1, %s27
      %s37 = scalar_select %p34, %s36, %s27
      %p38 = scmp.ge.s32.totalorder %s37, 2
      %s39 = scalar_select %p38, 0, %s37
      %s40 = ssub.s32 %s27, %s39
      %s41 = ssub.s32 %s28, %s35
      %s42 = sor.u32 %s40, %s41
      %p43 = scmp.eq.s32.totalorder %s42, 0
      %s45 = sadd.s32 %s44, 1
      %s46 = scalar_select %p43, %s44, %s45
      %p49 = pneg %p43
      %p50 = scmp.eq.s32.totalorder %s20, 3
      %p51 = por %p49, %p50
      %p52 = scmp.ne.s32.totalorder %s44, %s47
      %p53 = scmp.eq.s32.totalorder %s20, 0
      %p54 = por %p52, %p53
      %p55 = scmp.ne.s32.totalorder %s44, %s47
      %p56 = scmp.eq.s32.totalorder %s25, 3
      %p57 = por %p55, %p56
      %p58 = scmp.ne.s32.totalorder %s47, %s48
      %p59 = scmp.eq.s32.totalorder %s25, 0
      %p60 = por %p58, %p59
      %p61 = scmp.ne.s32.totalorder %s47, %s48
      %p62 = scmp.eq.s32.totalorder %s26, 3
      %p63 = por %p61, %p62
      %p65 = scmp.ne.s32.totalorder %s48, %s64
      %p66 = scmp.eq.s32.totalorder %s26, 0
      %p67 = por %p65, %p66
      %s69 = sadd.s32 %s68, 1
      %p72 = scmp.eq.s32.totalorder %s20, 3
      %p73 = scmp.ne.s32.totalorder %s68, %s70
      %p74 = scmp.eq.s32.totalorder %s20, 0
      %p75 = por %p73, %p74
      %p76 = scmp.ne.s32.totalorder %s68, %s70
      %p77 = scmp.eq.s32.totalorder %s25, 3
      %p78 = por %p76, %p77
      %p79 = scmp.ne.s32.totalorder %s70, %s71
      %p80 = scmp.eq.s32.totalorder %s25, 0
      %p81 = por %p79, %p80
      %p82 = scmp.ne.s32.totalorder %s70, %s71
      %p83 = scmp.eq.s32.totalorder %s26, 3
      %p84 = por %p82, %p83
      %p86 = scmp.ne.s32.totalorder %s71, %s85
      %p87 = scmp.eq.s32.totalorder %s26, 0
      %p88 = por %p86, %p87
      %s89 = ssub.s32 %s27, %s39
      %s90 = ssub.s32 %s28, %s35
      %s91 = sor.u32 %s89, %s90
      %p92 = scmp.eq.s32.totalorder %s91, 0
      %s94 = sadd.s32 %s93, 1
      %s95 = scalar_select %p92, %s93, %s94
      %p98 = pneg %p92
      %p99 = scmp.eq.s32.totalorder %s20, 3
      %p100 = por %p98, %p99
      %p101 = scmp.ne.s32.totalorder %s93, %s96
      %p102 = scmp.eq.s32.totalorder %s20, 0
      %p103 = por %p101, %p102
      %p104 = scmp.ne.s32.totalorder %s93, %s96
      %p105 = scmp.eq.s32.totalorder %s25, 3
      %p106 = por %p104, %p105
      %p107 = scmp.ne.s32.totalorder %s96, %s97
      %p108 = scmp.eq.s32.totalorder %s25, 0
      %p109 = por %p107, %p108
      %p110 = scmp.ne.s32.totalorder %s96, %s97
      %p111 = scmp.eq.s32.totalorder %s26, 3
      %p112 = por %p110, %p111
      %p114 = scmp.ne.s32.totalorder %s97, %s113
      %p115 = scmp.eq.s32.totalorder %s26, 0
      %p116 = por %p114, %p115
      %s117 = ssub.s32 %s27, %s39
      %s118 = ssub.s32 %s28, %s35
      %s119 = sor.u32 %s117, %s118
      %p120 = scmp.eq.s32.totalorder %s119, 0
      %s122 = sadd.s32 %s121, 1
      %s123 = scalar_select %p120, %s121, %s122
      %p126 = pneg %p120
      %p127 = scmp.eq.s32.totalorder %s20, 3
      %p128 = por %p126, %p127
      %p129 = scmp.ne.s32.totalorder %s121, %s124
      %p130 = scmp.eq.s32.totalorder %s20, 0
      %p131 = por %p129, %p130
      %p132 = scmp.ne.s32.totalorder %s121, %s124
      %p133 = scmp.eq.s32.totalorder %s25, 3
      %p134 = por %p132, %p133
      %p135 = scmp.ne.s32.totalorder %s124, %s125
      %p136 = scmp.eq.s32.totalorder %s25, 0
      %p137 = por %p135, %p136
      %p138 = scmp.ne.s32.totalorder %s124, %s125
      %p139 = scmp.eq.s32.totalorder %s26, 3
      %p140 = por %p138, %p139
      %p142 = scmp.ne.s32.totalorder %s125, %s141
      %p143 = scmp.eq.s32.totalorder %s26, 0
      %p144 = por %p142, %p143
      %p145 = scmp.le.s32.totalorder 1, %s20
      %p146 = scmp.lt.s32.totalorder %s20, 5
      %p147 = pnand %p145, %p146
      %p148 = pneg %p147
      // Predicated region
      $region9: #{tpu_custom_call.1} parent=5 // pred_check
        _
      $region10: #{tpu_custom_call.1} parent=5 // pred_check_branch
        %150 = sbr.rel (%p147) target = $region12
      $region11: #{tpu_custom_call.1} parent=5 // pred_region
        %s151 = ssub.s32 %s20, 1
        // Predicated region
        $region13: #{tpu_custom_call.1} parent=11 // pred_check
          %p152 = pneg %p81
        $region14: #{tpu_custom_call.1} parent=11 // pred_check_branch
          %154 = sbr.rel (%p152) target = $region16
        $region15: #{tpu_custom_call.1} parent=11 // pred_region
          %s156 = ssub.s32 576, 576
          %157 = vsyncadd [#allocation6], %s156
          %s158 = sshll.u32 [#allocation5], 4
          %s159 = int_to_ptr.vmem [resolvable:$true] %s158
          %164 = dma.hbm_to_vmem [thread:$0]  %s1, 576, %s159, [#allocation6], 64, 64, 4
        $region16: #{tpu_custom_call.1} parent=11 // pred_fallthru
          _
      $region12: #{tpu_custom_call.1} parent=5 // pred_fallthru
        _
      %p165 = scmp.lt.s32.totalorder %s20, 4
      // Predicated region
      $region17: #{tpu_custom_call.1} parent=5 // pred_check
        %p166 = pneg %p165
      $region18: #{tpu_custom_call.1} parent=5 // pred_check_branch
        %168 = sbr.rel (%p166) target = $region20
      $region19: #{tpu_custom_call.1} parent=5 // pred_region
        // Predicated region
        $region21: #{tpu_custom_call.1} parent=19 // pred_check
          %p169 = pneg %p54
        $region22: #{tpu_custom_call.1} parent=19 // pred_check_branch
          %171 = sbr.rel (%p169) target = $region24
        $region23: #{tpu_custom_call.1} parent=19 // pred_region
          %s172 = sand.u32 %s44, 1
          %s173 = scalar_lea.sflag [#allocation3], %s172
          %s174 = sand.u32 %s44, 1
          %s175 = smul.addr %s174, 240
          %s176 = scalar_lea.vmem [#allocation2], %s175
          %s178 = ssub.s32 3840, 3840
          %179 = vsyncadd %s173, %s178
          %s180 = smul.addr %s28, 30
          %s181 = smul.addr %s27, 60
          %s182 = sadd.s32 %s180, %s181
          %s183 = smul.addr %s182, 128
          %s184 = scalar_lea.hbm %s0, %s183
          %s185 = sshll.u32 %s176, 4
          %s186 = int_to_ptr.vmem [resolvable:$true] %s185
          %191 = dma.hbm_to_vmem [thread:$0]  %s184, 3840, %s186, %s173, 128, 128, 8
        $region24: #{tpu_custom_call.1} parent=19 // pred_fallthru
          _
      $region20: #{tpu_custom_call.1} parent=5 // pred_fallthru
        _
      %p192 = scmp.le.s32.totalorder 1, %s20
      %p193 = scmp.lt.s32.totalorder %s20, 5
      %p194 = pnand %p192, %p193
      %p195 = pneg %p194
      // Predicated region
      $region25: #{tpu_custom_call.1} parent=5 // pred_check
        _
      $region26: #{tpu_custom_call.1} parent=5 // pred_check_branch
        %197 = sbr.rel (%p194) target = $region28
      $region27: #{tpu_custom_call.1} parent=5 // pred_region
        %s198 = ssub.s32 %s20, 1
        %s199 = sand.u32 %s47, 1
        %s200 = scalar_lea.sflag [#allocation3], %s199
        %s201 = sand.u32 %s47, 1
        %s202 = smul.addr %s201, 240
        %s203 = scalar_lea.vmem [#allocation2], %s202
        // Predicated region
        $region29: #{tpu_custom_call.1} parent=27 // pred_check
          %p204 = pneg %p60
        $region30: #{tpu_custom_call.1} parent=27 // pred_check_branch
          %206 = sbr.rel (%p204) target = $region32
        $region31: #{tpu_custom_call.1} parent=27 // pred_region
          %207 = dma.done %s200, 3840
        $region32: #{tpu_custom_call.1} parent=27 // pred_fallthru
          _
        // Predicated region
        $region33: #{tpu_custom_call.1} parent=27 // pred_check
          %p208 = pneg %p81
        $region34: #{tpu_custom_call.1} parent=27 // pred_check_branch
          %210 = sbr.rel (%p208) target = $region36
        $region35: #{tpu_custom_call.1} parent=27 // pred_region
          %211 = dma.done [#allocation6], 576
        $region36: #{tpu_custom_call.1} parent=27 // pred_fallthru
          _
        %s212 = sand.u32 %s47, 1
        %s213 = scalar_lea.sflag [#allocation3], %s212
        %s214 = sand.u32 %s47, 1
        %s215 = smul.addr %s214, 240
        %s216 = scalar_lea.vmem [#allocation2], %s215
        %p217 = pneg %p60
        %p218 = pneg %p57
        %p219 = pneg %p81
        %p220 = pneg %p78
        %p221 = pneg %p109
        %p222 = pneg %p106
        %s223 = sand.u32 %s96, 1
        %s224 = scalar_lea.sflag [#allocation4], %s223
        %s225 = sand.u32 %s96, 1
        %s226 = smul.addr %s225, 128
        %s227 = scalar_lea.vmem [#allocation7], %s226
        %p228 = pneg %p137
        %p229 = pneg %p134
        %s230 = sand.u32 %s124, 1
        %s231 = scalar_lea.sflag [#allocation9], %s230
        %s232 = sand.u32 %s124, 1
        %s233 = smul.addr %s232, 2
        %s234 = scalar_lea.vmem [#allocation8], %s233
        %v236 = vld [vmem:[%s203] sm:$0xff]
        %v237 = vld [vmem:[%s203 + $0x8] sm:$0xff]
        %v238 = vld [vmem:[%s203 + $0x10] sm:$0x3]
        %v239 = vld [vmem:[%s203 + $0x18] sm:$0xff]
        %v240 = vld [vmem:[%s203 + $0x20] sm:$0xff]
        %v241 = vld [vmem:[%s203 + $0x28] sm:$0x3]
        %v242 = vld [vmem:[%s203 + $0x30] sm:$0xff]
        %v243 = vld [vmem:[%s203 + $0x38] sm:$0xff]
        %v244 = vld [vmem:[%s203 + $0x40] sm:$0x3]
        %v245 = vld [vmem:[%s203 + $0x48] sm:$0xff]
        %v246 = vld [vmem:[%s203 + $0x50] sm:$0xff]
        %v247 = vld [vmem:[%s203 + $0x58] sm:$0x3]
        %v248 = vld [vmem:[%s203 + $0x60] sm:$0xff]
        %v249 = vld [vmem:[%s203 + $0x68] sm:$0xff]
        %v250 = vld [vmem:[%s203 + $0x70] sm:$0x3]
        %v251 = vld [vmem:[%s203 + $0x78] sm:$0xff]
        %v252 = vld [vmem:[%s203 + $0x80] sm:$0xff]
        %v253 = vld [vmem:[%s203 + $0x88] sm:$0x3]
        %v254 = vld [vmem:[%s203 + $0x90] sm:$0xff]
        %v255 = vld [vmem:[%s203 + $0x98] sm:$0xff]
        %v256 = vld [vmem:[%s203 + $0xa0] sm:$0x3]
        %v257 = vld [vmem:[%s203 + $0xa8] sm:$0xff]
        %v258 = vld [vmem:[%s203 + $0xb0] sm:$0xff]
        %v259 = vld [vmem:[%s203 + $0xb8] sm:$0x3]
        %v260 = vld [vmem:[%s203 + $0xc0] sm:$0xff]
        %v261 = vld [vmem:[%s203 + $0xc8] sm:$0xff]
        %v262 = vld [vmem:[%s203 + $0xd0] sm:$0x3]
        %v263 = vld [vmem:[%s203 + $0xd8] sm:$0xff]
        %v264 = vld [vmem:[%s203 + $0xe0] sm:$0xff]
        %v265 = vld [vmem:[%s203 + $0xe8] sm:$0x3]
        %vm290 = vcmask 1046528
        %v291 = vrot.slane %v236, 1
        %v292 = vrot.slane %v237, 1
        %v293 = vsel %vm290, %v291, %v292
        %v294 = vrot.slane %v238, 1
        %v295 = vsel %vm290, %v292, %v294
        %v296 = vrot.slane %v239, 1
        %v297 = vrot.slane %v240, 1
        %v298 = vsel %vm290, %v296, %v297
        %v299 = vrot.slane %v241, 1
        %v300 = vsel %vm290, %v297, %v299
        %v301 = vrot.slane %v242, 1
        %v302 = vrot.slane %v243, 1
        %v303 = vsel %vm290, %v301, %v302
        %v304 = vrot.slane %v244, 1
        %v305 = vsel %vm290, %v302, %v304
        %v306 = vrot.slane %v245, 1
        %v307 = vrot.slane %v246, 1
        %v308 = vsel %vm290, %v306, %v307
        %v309 = vrot.slane %v247, 1
        %v310 = vsel %vm290, %v307, %v309
        %v311 = vrot.slane %v248, 1
        %v312 = vrot.slane %v249, 1
        %v313 = vsel %vm290, %v311, %v312
        %v314 = vrot.slane %v250, 1
        %v315 = vsel %vm290, %v312, %v314
        %v316 = vrot.slane %v251, 1
        %v317 = vrot.slane %v252, 1
        %v318 = vsel %vm290, %v316, %v317
        %v319 = vrot.slane %v253, 1
        %v320 = vsel %vm290, %v317, %v319
        %v321 = vrot.slane %v254, 1
        %v322 = vrot.slane %v255, 1
        %v323 = vsel %vm290, %v321, %v322
        %v324 = vrot.slane %v256, 1
        %v325 = vsel %vm290, %v322, %v324
        %v326 = vrot.slane %v257, 1
        %v327 = vrot.slane %v258, 1
        %v328 = vsel %vm290, %v326, %v327
        %v329 = vrot.slane %v259, 1
        %v330 = vsel %vm290, %v327, %v329
        %vm331 = vcmask 1045504
        %v332 = vrot.slane %v236, 2
        %v333 = vrot.slane %v237, 2
        %v334 = vsel %vm331, %v332, %v333
        %v335 = vrot.slane %v238, 2
        %v336 = vsel %vm331, %v333, %v335
        %v337 = vrot.slane %v239, 2
        %v338 = vrot.slane %v240, 2
        %v339 = vsel %vm331, %v337, %v338
        %v340 = vrot.slane %v241, 2
        %v341 = vsel %vm331, %v338, %v340
        %v342 = vrot.slane %v242, 2
        %v343 = vrot.slane %v243, 2
        %v344 = vsel %vm331, %v342, %v343
        %v345 = vrot.slane %v244, 2
        %v346 = vsel %vm331, %v343, %v345
        %v347 = vrot.slane %v245, 2
        %v348 = vrot.slane %v246, 2
        %v349 = vsel %vm331, %v347, %v348
        %v350 = vrot.slane %v247, 2
        %v351 = vsel %vm331, %v348, %v350
        %v352 = vrot.slane %v248, 2
        %v353 = vrot.slane %v249, 2
        %v354 = vsel %vm331, %v352, %v353
        %v355 = vrot.slane %v250, 2
        %v356 = vsel %vm331, %v353, %v355
        %v357 = vrot.slane %v251, 2
        %v358 = vrot.slane %v252, 2
        %v359 = vsel %vm331, %v357, %v358
        %v360 = vrot.slane %v253, 2
        %v361 = vsel %vm331, %v358, %v360
        %v362 = vrot.slane %v254, 2
        %v363 = vrot.slane %v255, 2
        %v364 = vsel %vm331, %v362, %v363
        %v365 = vrot.slane %v256, 2
        %v366 = vsel %vm331, %v363, %v365
        %v367 = vrot.slane %v257, 2
        %v368 = vrot.slane %v258, 2
        %v369 = vsel %vm331, %v367, %v368
        %v370 = vrot.slane %v259, 2
        %v371 = vsel %vm331, %v368, %v370
        %v375 = vrot.slane %v260, 1
        %v376 = vrot.slane %v261, 1
        %v377 = vsel %vm290, %v375, %v376
        %v378 = vrot.slane %v262, 1
        %v379 = vsel %vm290, %v376, %v378
        %v380 = vrot.slane %v260, 2
        %v381 = vrot.slane %v261, 2
        %v382 = vsel %vm331, %v380, %v381
        %v383 = vrot.slane %v262, 2
        %v384 = vsel %vm331, %v381, %v383
        %v388 = vrot.slane %v263, 1
        %v389 = vrot.slane %v264, 1
        %v390 = vsel %vm290, %v388, %v389
        %v391 = vrot.slane %v265, 1
        %v392 = vsel %vm290, %v389, %v391
        %v393 = vrot.slane %v263, 2
        %v394 = vrot.slane %v264, 2
        %v395 = vsel %vm331, %v393, %v394
        %v396 = vrot.slane %v265, 2
        %v397 = vsel %vm331, %v394, %v396
        %398 = vrot.lane.b32.xlu0 %v293, 8
        %v399 = vpop.permute.xlu0 %398
        %400 = vrot.lane.b32.xlu0 %v295, 8
        %v401 = vpop.permute.xlu0 %400
        %402 = vrot.lane.b32.xlu0 %v298, 8
        %v403 = vpop.permute.xlu0 %402
        %404 = vrot.lane.b32.xlu0 %v300, 8
        %v405 = vpop.permute.xlu0 %404
        %406 = vrot.lane.b32.xlu0 %v303, 8
        %v407 = vpop.permute.xlu0 %406
        %408 = vrot.lane.b32.xlu0 %v305, 8
        %v409 = vpop.permute.xlu0 %408
        %410 = vrot.lane.b32.xlu0 %v308, 8
        %v411 = vpop.permute.xlu0 %410
        %412 = vrot.lane.b32.xlu0 %v310, 8
        %v413 = vpop.permute.xlu0 %412
        %414 = vrot.lane.b32.xlu0 %v313, 8
        %v415 = vpop.permute.xlu0 %414
        %416 = vrot.lane.b32.xlu0 %v315, 8
        %v417 = vpop.permute.xlu0 %416
        %418 = vrot.lane.b32.xlu0 %v318, 8
        %v419 = vpop.permute.xlu0 %418
        %420 = vrot.lane.b32.xlu0 %v320, 8
        %v421 = vpop.permute.xlu0 %420
        %422 = vrot.lane.b32.xlu0 %v323, 8
        %v423 = vpop.permute.xlu0 %422
        %424 = vrot.lane.b32.xlu0 %v325, 8
        %v425 = vpop.permute.xlu0 %424
        %426 = vrot.lane.b32.xlu0 %v328, 8
        %v427 = vpop.permute.xlu0 %426
        %428 = vrot.lane.b32.xlu0 %v330, 8
        %v429 = vpop.permute.xlu0 %428
        %446 = vrot.lane.b32.xlu0 %v334, 16
        %v447 = vpop.permute.xlu0 %446
        %448 = vrot.lane.b32.xlu0 %v336, 16
        %v449 = vpop.permute.xlu0 %448
        %450 = vrot.lane.b32.xlu0 %v339, 16
        %v451 = vpop.permute.xlu0 %450
        %452 = vrot.lane.b32.xlu0 %v341, 16
        %v453 = vpop.permute.xlu0 %452
        %454 = vrot.lane.b32.xlu0 %v344, 16
        %v455 = vpop.permute.xlu0 %454
        %456 = vrot.lane.b32.xlu0 %v346, 16
        %v457 = vpop.permute.xlu0 %456
        %458 = vrot.lane.b32.xlu0 %v349, 16
        %v459 = vpop.permute.xlu0 %458
        %460 = vrot.lane.b32.xlu0 %v351, 16
        %v461 = vpop.permute.xlu0 %460
        %462 = vrot.lane.b32.xlu0 %v354, 16
        %v463 = vpop.permute.xlu0 %462
        %464 = vrot.lane.b32.xlu0 %v356, 16
        %v465 = vpop.permute.xlu0 %464
        %466 = vrot.lane.b32.xlu0 %v359, 16
        %v467 = vpop.permute.xlu0 %466
        %468 = vrot.lane.b32.xlu0 %v361, 16
        %v469 = vpop.permute.xlu0 %468
        %470 = vrot.lane.b32.xlu0 %v364, 16
        %v471 = vpop.permute.xlu0 %470
        %472 = vrot.lane.b32.xlu0 %v366, 16
        %v473 = vpop.permute.xlu0 %472
        %474 = vrot.lane.b32.xlu0 %v369, 16
        %v475 = vpop.permute.xlu0 %474
        %476 = vrot.lane.b32.xlu0 %v371, 16
        %v477 = vpop.permute.xlu0 %476
        %494 = vrot.lane.b32.xlu0 %v239, 24
        %v495 = vpop.permute.xlu0 %494
        %496 = vrot.lane.b32.xlu0 %v240, 24
        %v497 = vpop.permute.xlu0 %496
        %498 = vrot.lane.b32.xlu0 %v242, 24
        %v499 = vpop.permute.xlu0 %498
        %500 = vrot.lane.b32.xlu0 %v243, 24
        %v501 = vpop.permute.xlu0 %500
        %502 = vrot.lane.b32.xlu0 %v245, 24
        %v503 = vpop.permute.xlu0 %502
        %504 = vrot.lane.b32.xlu0 %v246, 24
        %v505 = vpop.permute.xlu0 %504
        %506 = vrot.lane.b32.xlu0 %v248, 24
        %v507 = vpop.permute.xlu0 %506
        %508 = vrot.lane.b32.xlu0 %v249, 24
        %v509 = vpop.permute.xlu0 %508
        %510 = vrot.lane.b32.xlu0 %v251, 24
        %v511 = vpop.permute.xlu0 %510
        %512 = vrot.lane.b32.xlu0 %v252, 24
        %v513 = vpop.permute.xlu0 %512
        %514 = vrot.lane.b32.xlu0 %v254, 24
        %v515 = vpop.permute.xlu0 %514
        %516 = vrot.lane.b32.xlu0 %v255, 24
        %v517 = vpop.permute.xlu0 %516
        %518 = vrot.lane.b32.xlu0 %v257, 24
        %v519 = vpop.permute.xlu0 %518
        %520 = vrot.lane.b32.xlu0 %v258, 24
        %v521 = vpop.permute.xlu0 %520
        %522 = vrot.lane.b32.xlu0 %v260, 24
        %v523 = vpop.permute.xlu0 %522
        %524 = vrot.lane.b32.xlu0 %v261, 24
        %v525 = vpop.permute.xlu0 %524
        %542 = vrot.lane.b32.xlu0 %v298, 32
        %v543 = vpop.permute.xlu0 %542
        %544 = vrot.lane.b32.xlu0 %v300, 32
        %v545 = vpop.permute.xlu0 %544
        %546 = vrot.lane.b32.xlu0 %v303, 32
        %v547 = vpop.permute.xlu0 %546
        %548 = vrot.lane.b32.xlu0 %v305, 32
        %v549 = vpop.permute.xlu0 %548
        %550 = vrot.lane.b32.xlu0 %v308, 32
        %v551 = vpop.permute.xlu0 %550
        %552 = vrot.lane.b32.xlu0 %v310, 32
        %v553 = vpop.permute.xlu0 %552
        %554 = vrot.lane.b32.xlu0 %v313, 32
        %v555 = vpop.permute.xlu0 %554
        %556 = vrot.lane.b32.xlu0 %v315, 32
        %v557 = vpop.permute.xlu0 %556
        %558 = vrot.lane.b32.xlu0 %v318, 32
        %v559 = vpop.permute.xlu0 %558
        %560 = vrot.lane.b32.xlu0 %v320, 32
        %v561 = vpop.permute.xlu0 %560
        %562 = vrot.lane.b32.xlu0 %v323, 32
        %v563 = vpop.permute.xlu0 %562
        %564 = vrot.lane.b32.xlu0 %v325, 32
        %v565 = vpop.permute.xlu0 %564
        %566 = vrot.lane.b32.xlu0 %v328, 32
        %v567 = vpop.permute.xlu0 %566
        %568 = vrot.lane.b32.xlu0 %v330, 32
        %v569 = vpop.permute.xlu0 %568
        %570 = vrot.lane.b32.xlu0 %v377, 32
        %v571 = vpop.permute.xlu0 %570
        %572 = vrot.lane.b32.xlu0 %v379, 32
        %v573 = vpop.permute.xlu0 %572
        %590 = vrot.lane.b32.xlu0 %v339, 40
        %v591 = vpop.permute.xlu0 %590
        %592 = vrot.lane.b32.xlu0 %v341, 40
        %v593 = vpop.permute.xlu0 %592
        %594 = vrot.lane.b32.xlu0 %v344, 40
        %v595 = vpop.permute.xlu0 %594
        %596 = vrot.lane.b32.xlu0 %v346, 40
        %v597 = vpop.permute.xlu0 %596
        %598 = vrot.lane.b32.xlu0 %v349, 40
        %v599 = vpop.permute.xlu0 %598
        %600 = vrot.lane.b32.xlu0 %v351, 40
        %v601 = vpop.permute.xlu0 %600
        %602 = vrot.lane.b32.xlu0 %v354, 40
        %v603 = vpop.permute.xlu0 %602
        %604 = vrot.lane.b32.xlu0 %v356, 40
        %v605 = vpop.permute.xlu0 %604
        %606 = vrot.lane.b32.xlu0 %v359, 40
        %v607 = vpop.permute.xlu0 %606
        %608 = vrot.lane.b32.xlu0 %v361, 40
        %v609 = vpop.permute.xlu0 %608
        %610 = vrot.lane.b32.xlu0 %v364, 40
        %v611 = vpop.permute.xlu0 %610
        %612 = vrot.lane.b32.xlu0 %v366, 40
        %v613 = vpop.permute.xlu0 %612
        %614 = vrot.lane.b32.xlu0 %v369, 40
        %v615 = vpop.permute.xlu0 %614
        %616 = vrot.lane.b32.xlu0 %v371, 40
        %v617 = vpop.permute.xlu0 %616
        %618 = vrot.lane.b32.xlu0 %v382, 40
        %v619 = vpop.permute.xlu0 %618
        %620 = vrot.lane.b32.xlu0 %v384, 40
        %v621 = vpop.permute.xlu0 %620
        %638 = vrot.lane.b32.xlu0 %v242, 48
        %v639 = vpop.permute.xlu0 %638
        %640 = vrot.lane.b32.xlu0 %v243, 48
        %v641 = vpop.permute.xlu0 %640
        %642 = vrot.lane.b32.xlu0 %v245, 48
        %v643 = vpop.permute.xlu0 %642
        %644 = vrot.lane.b32.xlu0 %v246, 48
        %v645 = vpop.permute.xlu0 %644
        %646 = vrot.lane.b32.xlu0 %v248, 48
        %v647 = vpop.permute.xlu0 %646
        %648 = vrot.lane.b32.xlu0 %v249, 48
        %v649 = vpop.permute.xlu0 %648
        %650 = vrot.lane.b32.xlu0 %v251, 48
        %v651 = vpop.permute.xlu0 %650
        %652 = vrot.lane.b32.xlu0 %v252, 48
        %v653 = vpop.permute.xlu0 %652
        %654 = vrot.lane.b32.xlu0 %v254, 48
        %v655 = vpop.permute.xlu0 %654
        %656 = vrot.lane.b32.xlu0 %v255, 48
        %v657 = vpop.permute.xlu0 %656
        %658 = vrot.lane.b32.xlu0 %v257, 48
        %v659 = vpop.permute.xlu0 %658
        %660 = vrot.lane.b32.xlu0 %v258, 48
        %v661 = vpop.permute.xlu0 %660
        %662 = vrot.lane.b32.xlu0 %v260, 48
        %v663 = vpop.permute.xlu0 %662
        %664 = vrot.lane.b32.xlu0 %v261, 48
        %v665 = vpop.permute.xlu0 %664
        %666 = vrot.lane.b32.xlu0 %v263, 48
        %v667 = vpop.permute.xlu0 %666
        %668 = vrot.lane.b32.xlu0 %v264, 48
        %v669 = vpop.permute.xlu0 %668
        %686 = vrot.lane.b32.xlu0 %v303, 56
        %v687 = vpop.permute.xlu0 %686
        %688 = vrot.lane.b32.xlu0 %v305, 56
        %v689 = vpop.permute.xlu0 %688
        %690 = vrot.lane.b32.xlu0 %v308, 56
        %v691 = vpop.permute.xlu0 %690
        %692 = vrot.lane.b32.xlu0 %v310, 56
        %v693 = vpop.permute.xlu0 %692
        %694 = vrot.lane.b32.xlu0 %v313, 56
        %v695 = vpop.permute.xlu0 %694
        %696 = vrot.lane.b32.xlu0 %v315, 56
        %v697 = vpop.permute.xlu0 %696
        %698 = vrot.lane.b32.xlu0 %v318, 56
        %v699 = vpop.permute.xlu0 %698
        %700 = vrot.lane.b32.xlu0 %v320, 56
        %v701 = vpop.permute.xlu0 %700
        %702 = vrot.lane.b32.xlu0 %v323, 56
        %v703 = vpop.permute.xlu0 %702
        %704 = vrot.lane.b32.xlu0 %v325, 56
        %v705 = vpop.permute.xlu0 %704
        %706 = vrot.lane.b32.xlu0 %v328, 56
        %v707 = vpop.permute.xlu0 %706
        %708 = vrot.lane.b32.xlu0 %v330, 56
        %v709 = vpop.permute.xlu0 %708
        %710 = vrot.lane.b32.xlu0 %v377, 56
        %v711 = vpop.permute.xlu0 %710
        %712 = vrot.lane.b32.xlu0 %v379, 56
        %v713 = vpop.permute.xlu0 %712
        %714 = vrot.lane.b32.xlu0 %v390, 56
        %v715 = vpop.permute.xlu0 %714
        %716 = vrot.lane.b32.xlu0 %v392, 56
        %v717 = vpop.permute.xlu0 %716
        %734 = vrot.lane.b32.xlu0 %v344, 64
        %v735 = vpop.permute.xlu0 %734
        %736 = vrot.lane.b32.xlu0 %v346, 64
        %v737 = vpop.permute.xlu0 %736
        %738 = vrot.lane.b32.xlu0 %v349, 64
        %v739 = vpop.permute.xlu0 %738
        %740 = vrot.lane.b32.xlu0 %v351, 64
        %v741 = vpop.permute.xlu0 %740
        %742 = vrot.lane.b32.xlu0 %v354, 64
        %v743 = vpop.permute.xlu0 %742
        %744 = vrot.lane.b32.xlu0 %v356, 64
        %v745 = vpop.permute.xlu0 %744
        %746 = vrot.lane.b32.xlu0 %v359, 64
        %v747 = vpop.permute.xlu0 %746
        %748 = vrot.lane.b32.xlu0 %v361, 64
        %v749 = vpop.permute.xlu0 %748
        %750 = vrot.lane.b32.xlu0 %v364, 64
        %v751 = vpop.permute.xlu0 %750
        %752 = vrot.lane.b32.xlu0 %v366, 64
        %v753 = vpop.permute.xlu0 %752
        %754 = vrot.lane.b32.xlu0 %v369, 64
        %v755 = vpop.permute.xlu0 %754
        %756 = vrot.lane.b32.xlu0 %v371, 64
        %v757 = vpop.permute.xlu0 %756
        %758 = vrot.lane.b32.xlu0 %v382, 64
        %v759 = vpop.permute.xlu0 %758
        %760 = vrot.lane.b32.xlu0 %v384, 64
        %v761 = vpop.permute.xlu0 %760
        %762 = vrot.lane.b32.xlu0 %v395, 64
        %v763 = vpop.permute.xlu0 %762
        %764 = vrot.lane.b32.xlu0 %v397, 64
        %v765 = vpop.permute.xlu0 %764
        %vm782 = vcmask 64512
        %v783 = vsel %vm782, %v236, %v399
        %v784 = vsel %vm782, %v237, %v401
        %v785 = vsel %vm782, %v239, %v403
        %v786 = vsel %vm782, %v240, %v405
        %v787 = vsel %vm782, %v242, %v407
        %v788 = vsel %vm782, %v243, %v409
        %v789 = vsel %vm782, %v245, %v411
        %v790 = vsel %vm782, %v246, %v413
        %v791 = vsel %vm782, %v248, %v415
        %v792 = vsel %vm782, %v249, %v417
        %v793 = vsel %vm782, %v251, %v419
        %v794 = vsel %vm782, %v252, %v421
        %v795 = vsel %vm782, %v254, %v423
        %v796 = vsel %vm782, %v255, %v425
        %v797 = vsel %vm782, %v257, %v427
        %v798 = vsel %vm782, %v258, %v429
        %vm799 = vcmask 130048
        %v800 = vsel %vm799, %v783, %v447
        %v801 = vsel %vm799, %v784, %v449
        %v802 = vsel %vm799, %v785, %v451
        %v803 = vsel %vm799, %v786, %v453
        %v804 = vsel %vm799, %v787, %v455
        %v805 = vsel %vm799, %v788, %v457
        %v806 = vsel %vm799, %v789, %v459
        %v807 = vsel %vm799, %v790, %v461
        %v808 = vsel %vm799, %v791, %v463
        %v809 = vsel %vm799, %v792, %v465
        %v810 = vsel %vm799, %v793, %v467
        %v811 = vsel %vm799, %v794, %v469
        %v812 = vsel %vm799, %v795, %v471
        %v813 = vsel %vm799, %v796, %v473
        %v814 = vsel %vm799, %v797, %v475
        %v815 = vsel %vm799, %v798, %v477
        %vm816 = vcmask 195584
        %v817 = vsel %vm816, %v800, %v495
        %v818 = vsel %vm816, %v801, %v497
        %v819 = vsel %vm816, %v802, %v499
        %v820 = vsel %vm816, %v803, %v501
        %v821 = vsel %vm816, %v804, %v503
        %v822 = vsel %vm816, %v805, %v505
        %v823 = vsel %vm816, %v806, %v507
        %v824 = vsel %vm816, %v807, %v509
        %v825 = vsel %vm816, %v808, %v511
        %v826 = vsel %vm816, %v809, %v513
        %v827 = vsel %vm816, %v810, %v515
        %v828 = vsel %vm816, %v811, %v517
        %v829 = vsel %vm816, %v812, %v519
        %v830 = vsel %vm816, %v813, %v521
        %v831 = vsel %vm816, %v814, %v523
        %v832 = vsel %vm816, %v815, %v525
        %vm833 = vcmask 261120
        %v834 = vsel %vm833, %v817, %v543
        %v835 = vsel %vm833, %v818, %v545
        %v836 = vsel %vm833, %v819, %v547
        %v837 = vsel %vm833, %v820, %v549
        %v838 = vsel %vm833, %v821, %v551
        %v839 = vsel %vm833, %v822, %v553
        %v840 = vsel %vm833, %v823, %v555
        %v841 = vsel %vm833, %v824, %v557
        %v842 = vsel %vm833, %v825, %v559
        %v843 = vsel %vm833, %v826, %v561
        %v844 = vsel %vm833, %v827, %v563
        %v845 = vsel %vm833, %v828, %v565
        %v846 = vsel %vm833, %v829, %v567
        %v847 = vsel %vm833, %v830, %v569
        %v848 = vsel %vm833, %v831, %v571
        %v849 = vsel %vm833, %v832, %v573
        %vm850 = vcmask 326656
        %v851 = vsel %vm850, %v834, %v591
        %v852 = vsel %vm850, %v835, %v593
        %v853 = vsel %vm850, %v836, %v595
        %v854 = vsel %vm850, %v837, %v597
        %v855 = vsel %vm850, %v838, %v599
        %v856 = vsel %vm850, %v839, %v601
        %v857 = vsel %vm850, %v840, %v603
        %v858 = vsel %vm850, %v841, %v605
        %v859 = vsel %vm850, %v842, %v607
        %v860 = vsel %vm850, %v843, %v609
        %v861 = vsel %vm850, %v844, %v611
        %v862 = vsel %vm850, %v845, %v613
        %v863 = vsel %vm850, %v846, %v615
        %v864 = vsel %vm850, %v847, %v617
        %v865 = vsel %vm850, %v848, %v619
        %v866 = vsel %vm850, %v849, %v621
        %vm867 = vcmask 392192
        %v868 = vsel %vm867, %v851, %v639
        %v869 = vsel %vm867, %v852, %v641
        %v870 = vsel %vm867, %v853, %v643
        %v871 = vsel %vm867, %v854, %v645
        %v872 = vsel %vm867, %v855, %v647
        %v873 = vsel %vm867, %v856, %v649
        %v874 = vsel %vm867, %v857, %v651
        %v875 = vsel %vm867, %v858, %v653
        %v876 = vsel %vm867, %v859, %v655
        %v877 = vsel %vm867, %v860, %v657
        %v878 = vsel %vm867, %v861, %v659
        %v879 = vsel %vm867, %v862, %v661
        %v880 = vsel %vm867, %v863, %v663
        %v881 = vsel %vm867, %v864, %v665
        %v882 = vsel %vm867, %v865, %v667
        %v883 = vsel %vm867, %v866, %v669
        %vm884 = vcmask 457728
        %v885 = vsel %vm884, %v868, %v687
        %v886 = vsel %vm884, %v869, %v689
        %v887 = vsel %vm884, %v870, %v691
        %v888 = vsel %vm884, %v871, %v693
        %v889 = vsel %vm884, %v872, %v695
        %v890 = vsel %vm884, %v873, %v697
        %v891 = vsel %vm884, %v874, %v699
        %v892 = vsel %vm884, %v875, %v701
        %v893 = vsel %vm884, %v876, %v703
        %v894 = vsel %vm884, %v877, %v705
        %v895 = vsel %vm884, %v878, %v707
        %v896 = vsel %vm884, %v879, %v709
        %v897 = vsel %vm884, %v880, %v711
        %v898 = vsel %vm884, %v881, %v713
        %v899 = vsel %vm884, %v882, %v715
        %v900 = vsel %vm884, %v883, %v717
        %vm901 = vcmask 523264
        %v902 = vsel %vm901, %v885, %v735
        %v903 = vsel %vm901, %v886, %v737
        %v904 = vsel %vm901, %v887, %v739
        %v905 = vsel %vm901, %v888, %v741
        %v906 = vsel %vm901, %v889, %v743
        %v907 = vsel %vm901, %v890, %v745
        %v908 = vsel %vm901, %v891, %v747
        %v909 = vsel %vm901, %v892, %v749
        %v910 = vsel %vm901, %v893, %v751
        %v911 = vsel %vm901, %v894, %v753
        %v912 = vsel %vm901, %v895, %v755
        %v913 = vsel %vm901, %v896, %v757
        %v914 = vsel %vm901, %v897, %v759
        %v915 = vsel %vm901, %v898, %v761
        %v916 = vsel %vm901, %v899, %v763
        %v917 = vsel %vm901, %v900, %v765
        %v918 = vpack.c.bf16 %v903, %v902
        %v919 = vpack.c.bf16 %v905, %v904
        %v920 = vpack.c.bf16 %v907, %v906
        %v921 = vpack.c.bf16 %v909, %v908
        %v922 = vpack.c.bf16 %v911, %v910
        %v923 = vpack.c.bf16 %v913, %v912
        %v924 = vpack.c.bf16 %v915, %v914
        %v925 = vpack.c.bf16 %v917, %v916
        %v926 = vld [vmem:[#allocation5] sm:$0xf]
        %v927 = vld [vmem:[#allocation5 + $0x4] sm:$0xf]
        %v928 = vld [vmem:[#allocation5 + $0x8] sm:$0xf]
        %v929 = vld [vmem:[#allocation5 + $0xc] sm:$0xf]
        %v930 = vld [vmem:[#allocation5 + $0x10] sm:$0xf]
        %v931 = vld [vmem:[#allocation5 + $0x14] sm:$0xf]
        %v932 = vld [vmem:[#allocation5 + $0x18] sm:$0xf]
        %v933 = vld [vmem:[#allocation5 + $0x1c] sm:$0xf]
        %v934 = vld [vmem:[#allocation5 + $0x20] sm:$0xf]
        %v944 = vunpack.c.l.b16 %v926
        %v945 = vunpack.c.l.b16 %v927
        %v946 = vunpack.c.l.b16 %v928
        %v947 = vunpack.c.l.b16 %v929
        %v948 = vunpack.c.l.b16 %v930
        %v949 = vunpack.c.l.b16 %v931
        %v950 = vunpack.c.l.b16 %v932
        %v951 = vunpack.c.l.b16 %v933
        %v952 = vunpack.c.l.b16 %v934
        %v953 = vpack.c.b16 %v945, %v944
        %v954 = vpack.c.b16 %v947, %v946
        %v955 = vpack.c.b16 %v949, %v948
        %v956 = vpack.c.b16 %v951, %v950
        %v957 = vpack.c.b16 %v952, %v952
        %vm962 = vcmask 588800
        %v964 = vsel %vm962, %v918, 0
        %v967 = vsel %vm962, %v919, 0
        %v970 = vsel %vm962, %v920, 0
        %v973 = vsel %vm962, %v921, 0
        %v976 = vsel %vm962, %v922, 0
        %v979 = vsel %vm962, %v923, 0
        %v982 = vsel %vm962, %v924, 0
        %v985 = vsel %vm962, %v925, 0
        %vm987 = vcmask 1043456
        %v989 = vsel %vm987, %v957, 0
        %991 = vmatprep.subr.bf16.mxu0 0
        %992 = vmatpush1.bf16.msra.mxu0 %v953
        %993 = vmatprep.subr.bf16.mxu0 0
        %994 = vmatpush1.bf16.msra.mxu0 %v954
        %995 = vmatprep.subr.bf16.mxu0 0
        %996 = vmatpush1.bf16.msra.mxu0 %v955
        %997 = vmatprep.subr.bf16.mxu0 0
        %998 = vmatpush1.bf16.msra.mxu0 %v956
        %999 = vmatprep.subr.bf16.mxu0 0
        %1000 = vmatpush1.bf16.msra.mxu0 %v989
        %1001 = vmatprep.subr.bf16.mxu0 0
        %1002 = vmatpush1.bf16.msra.mxu0 0
        %1003 = vmatprep.subr.bf16.mxu0 0
        %1004 = vmatpush1.bf16.msra.mxu0 0
        %1005 = vmatprep.subr.bf16.mxu0 0
        %1006 = vmatpush1.bf16.msra.mxu0 0
        %1007 = vmatprep.subr.bf16.mxu0 0
        %1008 = vmatpush1.bf16.msra.mxu0 0
        %1009 = vmatprep.subr.bf16.mxu0 0
        %1010 = vmatpush1.bf16.msra.mxu0 0
        %1011 = vmatprep.subr.bf16.mxu0 0
        %1012 = vmatpush1.bf16.msra.mxu0 0
        %1013 = vmatprep.subr.bf16.mxu0 0
        %1014 = vmatpush1.bf16.msra.mxu0 0
        %1015 = vmatprep.subr.bf16.mxu0 0
        %1016 = vmatpush1.bf16.msra.mxu0 0
        %1017 = vmatprep.subr.bf16.mxu0 0
        %1018 = vmatpush1.bf16.msra.mxu0 0
        %1019 = vmatprep.subr.bf16.mxu0 0
        %1020 = vmatpush1.bf16.msra.mxu0 0
        %1021 = vmatprep.subr.bf16.mxu0 0
        %1022 = vmatpush1.bf16.msra.mxu0 0
        %1023 = vmatprep.mubr.bf16.mxu0 0
        %1024 = vmatmul.mubr.bf16.gmra.mrb[0].mxu0 %v964
        %v1025 = vpop.f32.mrb[0].mxu0
        %v1026 = vadd.f32 0.0, %v1025
        %v1027 = vpop.f32.mrb[0].mxu0
        %v1028 = vpop.f32.mrb[0].mxu0
        %v1029 = vadd.f32 0.0, %v1028
        %v1030 = vpop.f32.mrb[0].mxu0
        %1031 = vmatprep.mubr.bf16.mxu0 0
        %1032 = vmatmul.mubr.bf16.gmra.mrb[0].mxu0 %v967
        %v1033 = vpop.f32.mrb[0].mxu0
        %v1034 = vadd.f32 0.0, %v1033
        %v1035 = vpop.f32.mrb[0].mxu0
        %v1036 = vpop.f32.mrb[0].mxu0
        %v1037 = vadd.f32 0.0, %v1036
        %v1038 = vpop.f32.mrb[0].mxu0
        %1039 = vmatprep.mubr.bf16.mxu0 0
        %1040 = vmatmul.mubr.bf16.gmra.mrb[0].mxu0 %v970
        %v1041 = vpop.f32.mrb[0].mxu0
        %v1042 = vadd.f32 0.0, %v1041
        %v1043 = vpop.f32.mrb[0].mxu0
        %v1044 = vpop.f32.mrb[0].mxu0
        %v1045 = vadd.f32 0.0, %v1044
        %v1046 = vpop.f32.mrb[0].mxu0
        %1047 = vmatprep.mubr.bf16.mxu0 0
        %1048 = vmatmul.mubr.bf16.gmra.mrb[0].mxu0 %v973
        %v1049 = vpop.f32.mrb[0].mxu0
        %v1050 = vadd.f32 0.0, %v1049
        %v1051 = vpop.f32.mrb[0].mxu0
        %v1052 = vpop.f32.mrb[0].mxu0
        %v1053 = vadd.f32 0.0, %v1052
        %v1054 = vpop.f32.mrb[0].mxu0
        %1055 = vmatprep.mubr.bf16.mxu0 0
        %1056 = vmatmul.mubr.bf16.gmra.mrb[0].mxu0 %v976
        %v1057 = vpop.f32.mrb[0].mxu0
        %v1058 = vadd.f32 0.0, %v1057
        %v1059 = vpop.f32.mrb[0].mxu0
        %v1060 = vpop.f32.mrb[0].mxu0
        %v1061 = vadd.f32 0.0, %v1060
        %v1062 = vpop.f32.mrb[0].mxu0
        %1063 = vmatprep.mubr.bf16.mxu0 0
        %1064 = vmatmul.mubr.bf16.gmra.mrb[0].mxu0 %v979
        %v1065 = vpop.f32.mrb[0].mxu0
        %v1066 = vadd.f32 0.0, %v1065
        %v1067 = vpop.f32.mrb[0].mxu0
        %v1068 = vpop.f32.mrb[0].mxu0
        %v1069 = vadd.f32 0.0, %v1068
        %v1070 = vpop.f32.mrb[0].mxu0
        %1071 = vmatprep.mubr.bf16.mxu0 0
        %1072 = vmatmul.mubr.bf16.gmra.mrb[0].mxu0 %v982
        %v1073 = vpop.f32.mrb[0].mxu0
        %v1074 = vadd.f32 0.0, %v1073
        %v1075 = vpop.f32.mrb[0].mxu0
        %v1076 = vpop.f32.mrb[0].mxu0
        %v1077 = vadd.f32 0.0, %v1076
        %v1078 = vpop.f32.mrb[0].mxu0
        %1079 = vmatprep.mubr.bf16.mxu0 0
        %1080 = vmatmul.mubr.bf16.gmra.mrb[0].mxu0 %v985
        %v1081 = vpop.f32.mrb[0].mxu0
        %v1082 = vadd.f32 0.0, %v1081
        %v1083 = vpop.f32.mrb[0].mxu0
        %v1084 = vpop.f32.mrb[0].mxu0
        %v1085 = vadd.f32 0.0, %v1084
        %v1086 = vpop.f32.mrb[0].mxu0
        %1087 = vdwg.mxu0
        %v1088 = vsel %vm867, %v1026, 0.0
        %v1089 = vsel %vm867, %v1029, 0.0
        %v1090 = vadd.f32 %v1088, %v1089
        %v1091 = vsel %vm867, %v1034, 0.0
        %v1092 = vadd.f32 %v1090, %v1091
        %v1093 = vsel %vm867, %v1037, 0.0
        %v1094 = vadd.f32 %v1092, %v1093
        %v1095 = vsel %vm867, %v1042, 0.0
        %v1096 = vadd.f32 %v1094, %v1095
        %v1097 = vsel %vm867, %v1045, 0.0
        %v1098 = vadd.f32 %v1096, %v1097
        %v1099 = vsel %vm867, %v1050, 0.0
        %v1100 = vadd.f32 %v1098, %v1099
        %v1101 = vsel %vm867, %v1053, 0.0
        %v1102 = vadd.f32 %v1100, %v1101
        %v1103 = vsel %vm867, %v1058, 0.0
        %v1104 = vadd.f32 %v1102, %v1103
        %v1105 = vsel %vm867, %v1061, 0.0
        %v1106 = vadd.f32 %v1104, %v1105
        %v1107 = vsel %vm867, %v1066, 0.0
        %v1108 = vadd.f32 %v1106, %v1107
        %v1109 = vsel %vm867, %v1069, 0.0
        %v1110 = vadd.f32 %v1108, %v1109
        %v1111 = vsel %vm867, %v1074, 0.0
        %v1112 = vadd.f32 %v1110, %v1111
        %v1113 = vsel %vm867, %v1077, 0.0
        %v1114 = vadd.f32 %v1112, %v1113
        %v1115 = vsel %vm867, %v1082, 0.0
        %v1116 = vadd.f32 %v1114, %v1115
        %v1117 = vsel %vm867, %v1085, 0.0
        %v1118 = vadd.f32 %v1116, %v1117
        %v1119 = vrot.slane %v1118, 4
        %v1120 = vadd.f32 %v1118, %v1119
        %v1121 = vrot.slane %v1120, 2
        %v1122 = vadd.f32 %v1120, %v1121
        %v1123 = vrot.slane %v1122, 1
        %v1124 = vadd.f32 %v1122, %v1123
        %v1125 = vmul.f32 %v1026, %v1026
        %v1126 = vmul.f32 %v1029, %v1029
        %v1127 = vmul.f32 %v1034, %v1034
        %v1128 = vmul.f32 %v1037, %v1037
        %v1129 = vmul.f32 %v1042, %v1042
        %v1130 = vmul.f32 %v1045, %v1045
        %v1131 = vmul.f32 %v1050, %v1050
        %v1132 = vmul.f32 %v1053, %v1053
        %v1133 = vmul.f32 %v1058, %v1058
        %v1134 = vmul.f32 %v1061, %v1061
        %v1135 = vmul.f32 %v1066, %v1066
        %v1136 = vmul.f32 %v1069, %v1069
        %v1137 = vmul.f32 %v1074, %v1074
        %v1138 = vmul.f32 %v1077, %v1077
        %v1139 = vmul.f32 %v1082, %v1082
        %v1140 = vmul.f32 %v1085, %v1085
        %v1141 = vsel %vm867, %v1125, 0.0
        %v1142 = vsel %vm867, %v1126, 0.0
        %v1143 = vadd.f32 %v1141, %v1142
        %v1144 = vsel %vm867, %v1127, 0.0
        %v1145 = vadd.f32 %v1143, %v1144
        %v1146 = vsel %vm867, %v1128, 0.0
        %v1147 = vadd.f32 %v1145, %v1146
        %v1148 = vsel %vm867, %v1129, 0.0
        %v1149 = vadd.f32 %v1147, %v1148
        %v1150 = vsel %vm867, %v1130, 0.0
        %v1151 = vadd.f32 %v1149, %v1150
        %v1152 = vsel %vm867, %v1131, 0.0
        %v1153 = vadd.f32 %v1151, %v1152
        %v1154 = vsel %vm867, %v1132, 0.0
        %v1155 = vadd.f32 %v1153, %v1154
        %v1156 = vsel %vm867, %v1133, 0.0
        %v1157 = vadd.f32 %v1155, %v1156
        %v1158 = vsel %vm867, %v1134, 0.0
        %v1159 = vadd.f32 %v1157, %v1158
        %v1160 = vsel %vm867, %v1135, 0.0
        %v1161 = vadd.f32 %v1159, %v1160
        %v1162 = vsel %vm867, %v1136, 0.0
        %v1163 = vadd.f32 %v1161, %v1162
        %v1164 = vsel %vm867, %v1137, 0.0
        %v1165 = vadd.f32 %v1163, %v1164
        %v1166 = vsel %vm867, %v1138, 0.0
        %v1167 = vadd.f32 %v1165, %v1166
        %v1168 = vsel %vm867, %v1139, 0.0
        %v1169 = vadd.f32 %v1167, %v1168
        %v1170 = vsel %vm867, %v1140, 0.0
        %v1171 = vadd.f32 %v1169, %v1170
        %v1172 = vrot.slane %v1171, 4
        %v1173 = vadd.f32 %v1171, %v1172
        %v1174 = vrot.slane %v1173, 2
        %v1175 = vadd.f32 %v1173, %v1174
        %v1176 = vrot.slane %v1175, 1
        %v1177 = vadd.f32 %v1175, %v1176
        %vm1178 = vcmask 1040384
        %v1179 = vsel %vm1178, %v1124, %v1177
        %vm1180 = vcmask 386048
        %1181 = vst.msk [vmem:[%s234] sm:$0x3] %vm1180, %v1179
        %1182 = vst.msk [vmem:[%s227] sm:$0xff] %vm867, %v1026
        %1183 = vst.msk [vmem:[%s227 + $0x8] sm:$0xff] %vm867, %v1029
        %1184 = vst.msk [vmem:[%s227 + $0x10] sm:$0xff] %vm867, %v1034
        %1185 = vst.msk [vmem:[%s227 + $0x18] sm:$0xff] %vm867, %v1037
        %1186 = vst.msk [vmem:[%s227 + $0x20] sm:$0xff] %vm867, %v1042
        %1187 = vst.msk [vmem:[%s227 + $0x28] sm:$0xff] %vm867, %v1045
        %1188 = vst.msk [vmem:[%s227 + $0x30] sm:$0xff] %vm867, %v1050
        %1189 = vst.msk [vmem:[%s227 + $0x38] sm:$0xff] %vm867, %v1053
        %1190 = vst.msk [vmem:[%s227 + $0x40] sm:$0xff] %vm867, %v1058
        %1191 = vst.msk [vmem:[%s227 + $0x48] sm:$0xff] %vm867, %v1061
        %1192 = vst.msk [vmem:[%s227 + $0x50] sm:$0xff] %vm867, %v1066
        %1193 = vst.msk [vmem:[%s227 + $0x58] sm:$0xff] %vm867, %v1069
        %1194 = vst.msk [vmem:[%s227 + $0x60] sm:$0xff] %vm867, %v1074
        %1195 = vst.msk [vmem:[%s227 + $0x68] sm:$0xff] %vm867, %v1077
        %1196 = vst.msk [vmem:[%s227 + $0x70] sm:$0xff] %vm867, %v1082
        %1197 = vst.msk [vmem:[%s227 + $0x78] sm:$0xff] %vm867, %v1085
        %s1198 = sand.u32 %s96, 1
        %s1199 = scalar_lea.sflag [#allocation4], %s1198
        %s1200 = sand.u32 %s96, 1
        %s1201 = smul.addr %s1200, 128
        %s1202 = scalar_lea.vmem [#allocation7], %s1201
        %s1203 = sand.u32 %s124, 1
        %s1204 = scalar_lea.sflag [#allocation9], %s1203
        %s1205 = sand.u32 %s124, 1
        %s1206 = smul.addr %s1205, 2
        %s1207 = scalar_lea.vmem [#allocation8], %s1206
        // Predicated region
        $region37: #{tpu_custom_call.1} parent=27 // pred_check
          %p1208 = pneg %p106
        $region38: #{tpu_custom_call.1} parent=27 // pred_check_branch
          %1210 = sbr.rel (%p1208) target = $region40
        $region39: #{tpu_custom_call.1} parent=27 // pred_region
          %s1212 = ssub.s32 2048, 2048
          %1213 = vsyncadd %s1199, %s1212
          %s1214 = smul.addr %s30, 16
          %s1215 = smul.addr %s29, 32
          %s1216 = sadd.s32 %s1214, %s1215
          %s1217 = smul.addr %s1216, 128
          %s1218 = scalar_lea.hbm %s2, %s1217
          %s1219 = sshll.u32 %s1202, 4
          %s1220 = int_to_ptr.vmem [resolvable:$true] %s1219
          %1225 = dma.vmem_to_hbm [thread:$0]  %s1220, 2048, %s1218, %s1199, 128, 128, 8
        $region40: #{tpu_custom_call.1} parent=27 // pred_fallthru
          _
        // Predicated region
        $region41: #{tpu_custom_call.1} parent=27 // pred_check
          %p1226 = pneg %p134
        $region42: #{tpu_custom_call.1} parent=27 // pred_check_branch
          %1228 = sbr.rel (%p1226) target = $region44
        $region43: #{tpu_custom_call.1} parent=27 // pred_region
          %s1230 = ssub.s32 32, 32
          %1231 = vsyncadd %s1204, %s1230
          %s1232 = smul.addr %s29, 2
          %s1233 = sadd.s32 %s30, %s1232
          %s1234 = smul.addr %s1233, 32
          %s1235 = scalar_lea.hbm %s3, %s1234
          %s1237 = sshll.u32 %s1207, 4
          %s1238 = int_to_ptr.vmem [resolvable:$true] %s1237
          %1240 = dma.vmem_to_hbm [thread:$0]  %s1238, 32, %s1235, %s1204
        $region44: #{tpu_custom_call.1} parent=27 // pred_fallthru
          _
      $region28: #{tpu_custom_call.1} parent=5 // pred_fallthru
        _
      %p1241 = scmp.le.s32.totalorder 2, %s20
      // Predicated region
      $region45: #{tpu_custom_call.1} parent=5 // pred_check
        %p1242 = pneg %p1241
      $region46: #{tpu_custom_call.1} parent=5 // pred_check_branch
        %1244 = sbr.rel (%p1242) target = $region48
      $region47: #{tpu_custom_call.1} parent=5 // pred_region
        %s1245 = ssub.s32 %s20, 2
        // Predicated region
        $region49: #{tpu_custom_call.1} parent=47 // pred_check
          %p1246 = pneg %p112
        $region50: #{tpu_custom_call.1} parent=47 // pred_check_branch
          %1248 = sbr.rel (%p1246) target = $region52
        $region51: #{tpu_custom_call.1} parent=47 // pred_region
          %s1249 = sand.u32 %s97, 1
          %s1250 = scalar_lea.sflag [#allocation4], %s1249
          %s1251 = sand.u32 %s97, 1
          %s1252 = smul.addr %s1251, 128
          %s1253 = scalar_lea.vmem [#allocation7], %s1252
          %1254 = dma.done %s1250, 2048
        $region52: #{tpu_custom_call.1} parent=47 // pred_fallthru
          _
        // Predicated region
        $region53: #{tpu_custom_call.1} parent=47 // pred_check
          %p1255 = pneg %p140
        $region54: #{tpu_custom_call.1} parent=47 // pred_check_branch
          %1257 = sbr.rel (%p1255) target = $region56
        $region55: #{tpu_custom_call.1} parent=47 // pred_region
          %s1258 = sand.u32 %s125, 1
          %s1259 = scalar_lea.sflag [#allocation9], %s1258
          %s1260 = sand.u32 %s125, 1
          %s1261 = smul.addr %s1260, 2
          %s1262 = scalar_lea.vmem [#allocation8], %s1261
          %1263 = dma.done %s1259, 32
        $region56: #{tpu_custom_call.1} parent=47 // pred_fallthru
          _
      $region48: #{tpu_custom_call.1} parent=5 // pred_fallthru
        _
    $region6: #{tpu_custom_call.1} parent=1 // loop_footer
      %s24 = sadd.s32 1, %s20
    $region7: #{tpu_custom_call.1} parent=1 // loop_footer_branch
      %19 = sbr.rel target = $region3
    $region8: #{tpu_custom_call.1} parent=1 // loop_exit
      _
    %1264 = vsyncpa [#allocation3], 1
    %s1265 = scalar_lea.sflag [#allocation3], 1
    %1266 = vsyncpa %s1265, 1
    %1267 = vsyncpa [#allocation6], 1
    %1268 = vsyncpa [#allocation4], 1
    %s1269 = scalar_lea.sflag [#allocation4], 1
    %1270 = vsyncpa %s1269, 1
    %1271 = vsyncpa [#allocation9], 1
    %s1272 = scalar_lea.sflag [#allocation9], 1
    %1273 = vsyncpa %s1272, 1

</llo_original>
